<compile_context>
chip_gen: v7x
topology: tpu7x:2x2x1
jax: 0.10.0
libtpu: 0.0.40
codegen_flags: <defaults>
</compile_context>

<pallas_src>
import jax
import jax.numpy as jnp
import numpy as np
from jax.experimental import pallas as pl
from jax.experimental.pallas import tpu as pltpu


def _label_attention_kernel(x_int_ref, x_slot_ref,
                            w_int_ref, wt_int_ref,
                            w_slot_ref, wt_slot_ref,
                            out_int_ref, out_slot_ref):
    def branch(x_ref, w_ref, wt_ref, out_ref):
        x = x_ref[...]                                        # [TM, D]
        wt = wt_ref[...]                                      # [D, N] (pre-transposed)
        scores = jnp.dot(x, wt,
                         preferred_element_type=jnp.float32)  # [TM, N]
        scores = scores - jnp.max(scores, axis=-1, keepdims=True)
        p = jnp.exp(scores)
        # Exact f32 divide: kernel is HBM-bound, so the extra EUP/VPU work is free
        # and we avoid the ~1e-3 error of the approximate reciprocal.
        p = p / jnp.sum(p, axis=-1, keepdims=True)
        w = w_ref[...]                                        # [N, D]
        ctx = jnp.dot(p.astype(w.dtype), w,
                      preferred_element_type=jnp.float32)     # [TM, D]
        out_ref[...] = ctx.astype(out_ref.dtype)              # single lane-dense store

    branch(x_int_ref, w_int_ref, wt_int_ref, out_int_ref)
    branch(x_slot_ref, w_slot_ref, wt_slot_ref, out_slot_ref)


def _choose_block_rows(M, D, dtype_bytes, block_rows, vmem_budget_bytes):
    """Pick a sublane-aligned row-tile size that fits the VMEM budget and keeps
    >=2 grid steps when M is cleanly splittable (v7x has 2 TensorCores)."""
    block_rows = max(8, (block_rows // 8) * 8)
    if M <= block_rows:
        bm = M
        half = M // 2
        if half >= 8 and half % 8 == 0:
            bm = half
    else:
        bm = block_rows

    # Double-buffered working set per step: (2 inputs + 2 outputs) x 2 buffers.
    def step_bytes(b):
        return 2 * 4 * b * D * dtype_bytes

    while bm > 8 and step_bytes(bm) > vmem_budget_bytes:
        bm = max(8, ((bm // 2) // 8) * 8)
    return bm


def label_attention(input_intent, input_slot, mask, w_intent, w_slot, *,
                    block_rows=512):
    """Pallas implementation of Label_Attention.forward.

    `mask` is accepted for signature parity with the torch module but is unused
    (the original forward never touches it)."""
    del mask
    B, S, D = input_intent.shape
    M = B * S
    x_int = input_intent.reshape(M, D)
    x_slot = input_slot.reshape(M, D)
    n_int = w_intent.shape[0]
    n_slot = w_slot.shape[0]
    dtype_bytes = jnp.dtype(input_intent.dtype).itemsize

    # Pre-transpose the label tables once in the wrapper (grid-invariant tiles),
    # so the kernel never transposes a weight tile per grid step.
    wt_intent = w_intent.T      # [D, n_int]
    wt_slot = w_slot.T          # [D, n_slot]

    # Resident weight bytes: W and W^T for both branches (assume double-buffered).
    weights_bytes = 2 * 2 * (n_int + n_slot) * D * dtype_bytes
    vmem_budget = (48 << 20) - weights_bytes   # fits v7x's 64 MiB VMEM w/ headroom
    bm = _choose_block_rows(M, D, dtype_bytes, block_rows, vmem_budget)

    grid = (pl.cdiv(M, bm),)

    x_spec = pl.BlockSpec((bm, D), lambda i: (i, 0))
    out_spec = pl.BlockSpec((bm, D), lambda i: (i, 0))
    # Grid-invariant weights: constant block index -> fetched once, kept resident.
    w_int_spec = pl.BlockSpec((n_int, D), lambda i: (0, 0))
    wt_int_spec = pl.BlockSpec((D, n_int), lambda i: (0, 0))
    w_slot_spec = pl.BlockSpec((n_slot, D), lambda i: (0, 0))
    wt_slot_spec = pl.BlockSpec((D, n_slot), lambda i: (0, 0))

    # Explicit VMEM limit so large row tiles are not capped by the scoped default
    # (16 MiB on v5e / 32 MiB on v6e+v7x).
    needed = 2 * 4 * bm * D * dtype_bytes + weights_bytes + (2 << 20)
    vmem_limit = int(min(max(needed, 32 << 20), 100 << 20))

    # Advisory cost hint so XLA overlaps neighbours with this mem-bound call.
    cost = pl.CostEstimate(
        flops=4 * M * D * (n_int + n_slot),
        transcendentals=M * (n_int + n_slot),
        bytes_accessed=(4 * M * D + 2 * (n_int + n_slot) * D) * dtype_bytes,
    )

    out_int, out_slot = pl.pallas_call(
        _label_attention_kernel,
        grid=grid,
        in_specs=[x_spec, x_spec,
                  w_int_spec, wt_int_spec,
                  w_slot_spec, wt_slot_spec],
        out_specs=(out_spec, out_spec),
        out_shape=(jax.ShapeDtypeStruct((M, D), input_intent.dtype),
                   jax.ShapeDtypeStruct((M, D), input_slot.dtype)),
        compiler_params=pltpu.CompilerParams(
            dimension_semantics=("parallel",),
            vmem_limit_bytes=vmem_limit),
        cost_estimate=cost,
    )(x_int, x_slot, w_intent, wt_intent, w_slot, wt_slot)

    # Match torch return order: (intent_res, slot_res)
    return out_int.reshape(B, S, D), out_slot.reshape(B, S, D)


def _reference(input_intent, input_slot, w_intent, w_slot):
    """Plain-JAX reimplementation of the torch forward (correctness check)."""
    s_i = jnp.einsum("bsd,nd->bsn", input_intent, w_intent)
    p_i = jax.nn.softmax(s_i, axis=-1)
    r_i = jnp.einsum("bsn,nd->bsd", p_i, w_intent)
    s_s = jnp.einsum("bsd,nd->bsn", input_slot, w_slot)
    p_s = jax.nn.softmax(s_s, axis=-1)
    r_s = jnp.einsum("bsn,nd->bsd", p_s, w_slot)
    return r_i, r_s


if __name__ == "__main__":
    B, S, D = 2, 8, 32
    n_intent, n_slot = 16, 32

    key = jax.random.PRNGKey(0)
    k_int, k_slot, k_wi, k_ws = jax.random.split(key, 4)

    input_intent = jax.random.normal(k_int, (B, S, D), jnp.float32)
    input_slot = jax.random.normal(k_slot, (B, S, D), jnp.float32)
    mask = jnp.ones((B, S), jnp.float32)  # present in the torch signature, unused

    # Label embedding tables (nn.Embedding-style weights: [num_labels, D]).
    w_intent = jax.random.normal(k_wi, (n_intent, D), jnp.float32)
    w_slot = jax.random.normal(k_ws, (n_slot, D), jnp.float32)

    intent_res, slot_res = label_attention(input_intent, input_slot, mask,
                                           w_intent, w_slot)
    jax.block_until_ready((intent_res, slot_res))

    ref_intent, ref_slot = _reference(input_intent, input_slot, w_intent, w_slot)
    np.testing.assert_allclose(np.asarray(intent_res), np.asarray(ref_intent),
                               rtol=1e-4, atol=1e-4)
    np.testing.assert_allclose(np.asarray(slot_res), np.asarray(ref_slot),
                               rtol=1e-4, atol=1e-4)

    print("KERNEL_OK")
</pallas_src>

<mosaic_0001>
module attributes {stable_mosaic.version = 11 : i64} {
  func.func @_label_attention_kernel(%arg0: i32, %arg1: memref<8x32xf32, #tpu.memory_space<vmem>>, %arg2: memref<8x32xf32, #tpu.memory_space<vmem>>, %arg3: memref<16x32xf32, #tpu.memory_space<vmem>>, %arg4: memref<32x16xf32, #tpu.memory_space<vmem>>, %arg5: memref<32x32xf32, #tpu.memory_space<vmem>>, %arg6: memref<32x32xf32, #tpu.memory_space<vmem>>, %arg7: memref<8x32xf32, #tpu.memory_space<vmem>>, %arg8: memref<8x32xf32, #tpu.memory_space<vmem>>) attributes {dimension_semantics = [#tpu.dimension_semantics<parallel>], iteration_bounds = array<i64: 2>, scalar_prefetch = 0 : i64, scratch_operands = 0 : i64, tpu.core_type = #tpu.core_type<tc>, window_params = [{transform_indices = @transform_0, window_bounds = array<i64: 8, 32>}, {transform_indices = @transform_1, window_bounds = array<i64: 8, 32>}, {pipeline_mode = #tpu.pipeline_mode<synchronous>, transform_indices = @transform_2, window_bounds = array<i64: 16, 32>}, {pipeline_mode = #tpu.pipeline_mode<synchronous>, transform_indices = @transform_3, window_bounds = array<i64: 32, 16>}, {pipeline_mode = #tpu.pipeline_mode<synchronous>, transform_indices = @transform_4, window_bounds = array<i64: 32, 32>}, {pipeline_mode = #tpu.pipeline_mode<synchronous>, transform_indices = @transform_5, window_bounds = array<i64: 32, 32>}, {transform_indices = @transform_6, window_bounds = array<i64: 8, 32>}, {transform_indices = @transform_7, window_bounds = array<i64: 8, 32>}]} {
    %c0 = arith.constant 0 : index
    %c0_0 = arith.constant 0 : index
    %0 = vector.load %arg1[%c0, %c0_0] : memref<8x32xf32, #tpu.memory_space<vmem>>, vector<8x32xf32>
    %c0_1 = arith.constant 0 : index
    %c0_2 = arith.constant 0 : index
    %1 = vector.load %arg4[%c0_1, %c0_2] : memref<32x16xf32, #tpu.memory_space<vmem>>, vector<32x16xf32>
    %cst = arith.constant dense<0.000000e+00> : vector<8x16xf32>
    %2 = tpu.matmul %0, %1, %cst {dimension_numbers = #tpu.dot_dimension_numbers<[1], [0], [0], [1], [0, 0, 1, 1], [], []>} : vector<8x32xf32>, vector<32x16xf32>, vector<8x16xf32> -> vector<8x16xf32>
    %cst_3 = arith.constant dense<0xFF800000> : vector<8xf32>
    %3 = vector.multi_reduction <maximumf>, %2, %cst_3 [1] : vector<8x16xf32> to vector<8xf32>
    %4 = vector.shape_cast %3 : vector<8xf32> to vector<8x1xf32>
    %5 = vector.broadcast %4 : vector<8x1xf32> to vector<8x16xf32>
    %6 = arith.subf %2, %5 : vector<8x16xf32>
    %7 = math.exp %6 : vector<8x16xf32>
    %cst_4 = arith.constant dense<0.000000e+00> : vector<8xf32>
    %8 = vector.multi_reduction <add>, %7, %cst_4 [1] : vector<8x16xf32> to vector<8xf32>
    %9 = vector.shape_cast %8 : vector<8xf32> to vector<8x1xf32>
    %10 = vector.broadcast %9 : vector<8x1xf32> to vector<8x16xf32>
    %11 = arith.divf %7, %10 : vector<8x16xf32>
    %c0_5 = arith.constant 0 : index
    %c0_6 = arith.constant 0 : index
    %12 = vector.load %arg3[%c0_5, %c0_6] : memref<16x32xf32, #tpu.memory_space<vmem>>, vector<16x32xf32>
    %cst_7 = arith.constant dense<0.000000e+00> : vector<8x32xf32>
    %13 = tpu.matmul %11, %12, %cst_7 {dimension_numbers = #tpu.dot_dimension_numbers<[1], [0], [0], [1], [0, 0, 1, 1], [], []>} : vector<8x16xf32>, vector<16x32xf32>, vector<8x32xf32> -> vector<8x32xf32>
    %c0_8 = arith.constant 0 : index
    %c0_9 = arith.constant 0 : index
    %14 = vector.load %arg7[%c0_8, %c0_9] : memref<8x32xf32, #tpu.memory_space<vmem>>, vector<8x32xf32>
    tpu.vector_store %arg7[%c0_8, %c0_9], %13 {strides = array<i32>} : memref<8x32xf32, #tpu.memory_space<vmem>>, vector<8x32xf32>,
    %c0_10 = arith.constant 0 : index
    %c0_11 = arith.constant 0 : index
    %15 = vector.load %arg2[%c0_10, %c0_11] : memref<8x32xf32, #tpu.memory_space<vmem>>, vector<8x32xf32>
    %c0_12 = arith.constant 0 : index
    %c0_13 = arith.constant 0 : index
    %16 = vector.load %arg6[%c0_12, %c0_13] : memref<32x32xf32, #tpu.memory_space<vmem>>, vector<32x32xf32>
    %cst_14 = arith.constant dense<0.000000e+00> : vector<8x32xf32>
    %17 = tpu.matmul %15, %16, %cst_14 {dimension_numbers = #tpu.dot_dimension_numbers<[1], [0], [0], [1], [0, 0, 1, 1], [], []>} : vector<8x32xf32>, vector<32x32xf32>, vector<8x32xf32> -> vector<8x32xf32>
    %cst_15 = arith.constant dense<0xFF800000> : vector<8xf32>
    %18 = vector.multi_reduction <maximumf>, %17, %cst_15 [1] : vector<8x32xf32> to vector<8xf32>
    %19 = vector.shape_cast %18 : vector<8xf32> to vector<8x1xf32>
    %20 = vector.broadcast %19 : vector<8x1xf32> to vector<8x32xf32>
    %21 = arith.subf %17, %20 : vector<8x32xf32>
    %22 = math.exp %21 : vector<8x32xf32>
    %cst_16 = arith.constant dense<0.000000e+00> : vector<8xf32>
    %23 = vector.multi_reduction <add>, %22, %cst_16 [1] : vector<8x32xf32> to vector<8xf32>
    %24 = vector.shape_cast %23 : vector<8xf32> to vector<8x1xf32>
    %25 = vector.broadcast %24 : vector<8x1xf32> to vector<8x32xf32>
    %26 = arith.divf %22, %25 : vector<8x32xf32>
    %c0_17 = arith.constant 0 : index
    %c0_18 = arith.constant 0 : index
    %27 = vector.load %arg5[%c0_17, %c0_18] : memref<32x32xf32, #tpu.memory_space<vmem>>, vector<32x32xf32>
    %cst_19 = arith.constant dense<0.000000e+00> : vector<8x32xf32>
    %28 = tpu.matmul %26, %27, %cst_19 {dimension_numbers = #tpu.dot_dimension_numbers<[1], [0], [0], [1], [0, 0, 1, 1], [], []>} : vector<8x32xf32>, vector<32x32xf32>, vector<8x32xf32> -> vector<8x32xf32>
    %c0_20 = arith.constant 0 : index
    %c0_21 = arith.constant 0 : index
    %29 = vector.load %arg8[%c0_20, %c0_21] : memref<8x32xf32, #tpu.memory_space<vmem>>, vector<8x32xf32>
    tpu.vector_store %arg8[%c0_20, %c0_21], %28 {strides = array<i32>} : memref<8x32xf32, #tpu.memory_space<vmem>>, vector<8x32xf32>,
    return
  }
  func.func @transform_0(%arg0: i32) -> (i32, i32) {
    %c0_i32 = arith.constant 0 : i32
    %c0_i32_0 = arith.constant 0 : i32
    return %arg0, %c0_i32 : i32, i32
  }
  func.func @transform_1(%arg0: i32) -> (i32, i32) {
    %c0_i32 = arith.constant 0 : i32
    %c0_i32_0 = arith.constant 0 : i32
    return %arg0, %c0_i32 : i32, i32
  }
  func.func @transform_2(%arg0: i32) -> (i32, i32) {
    %c0_i32 = arith.constant 0 : i32
    %c0_i32_0 = arith.constant 0 : i32
    %c0_i32_1 = arith.constant 0 : i32
    return %c0_i32, %c0_i32_0 : i32, i32
  }
  func.func @transform_3(%arg0: i32) -> (i32, i32) {
    %c0_i32 = arith.constant 0 : i32
    %c0_i32_0 = arith.constant 0 : i32
    %c0_i32_1 = arith.constant 0 : i32
    return %c0_i32, %c0_i32_0 : i32, i32
  }
  func.func @transform_4(%arg0: i32) -> (i32, i32) {
    %c0_i32 = arith.constant 0 : i32
    %c0_i32_0 = arith.constant 0 : i32
    %c0_i32_1 = arith.constant 0 : i32
    return %c0_i32, %c0_i32_0 : i32, i32
  }
  func.func @transform_5(%arg0: i32) -> (i32, i32) {
    %c0_i32 = arith.constant 0 : i32
    %c0_i32_0 = arith.constant 0 : i32
    %c0_i32_1 = arith.constant 0 : i32
    return %c0_i32, %c0_i32_0 : i32, i32
  }
  func.func @transform_6(%arg0: i32) -> (i32, i32) {
    %c0_i32 = arith.constant 0 : i32
    %c0_i32_0 = arith.constant 0 : i32
    return %arg0, %c0_i32 : i32, i32
  }
  func.func @transform_7(%arg0: i32) -> (i32, i32) {
    %c0_i32 = arith.constant 0 : i32
    %c0_i32_0 = arith.constant 0 : i32
    return %arg0, %c0_i32 : i32, i32
  }
}

</mosaic_0001>

<llo_original>
// kernel: tpu_custom_call.1
$region0: #{tpu_custom_call.1}
  #allocation0 [shape = 'u32[]', space=smem, size = 0x4, offset = 0x4, fixed_abs, tag = 'smem constant byte address 0x4 - core index']
  #allocation1 [shape = 'u32[144,128]{1,0:T(1,128)}', space=vmem, size = 0x12000, scoped, tag = 'internal scratch']
  %s0 = inlined_call_operand.hbm [shape: f32[16,32], index: 0, kind: input, shape index: {}]
  %s1 = inlined_call_operand.hbm [shape: f32[16,32], index: 1, kind: input, shape index: {}]
  %s2 = inlined_call_operand.hbm [shape: f32[16,32], index: 2, kind: input, shape index: {}]
  %s3 = inlined_call_operand.vmem [shape: f32[32,16], index: 3, kind: input, shape index: {}]
  %s4 = inlined_call_operand.vmem [shape: f32[32,32], index: 4, kind: input, shape index: {}]
  %s5 = inlined_call_operand.vmem [shape: f32[32,32], index: 5, kind: input, shape index: {}]
  %s6 = inlined_call_operand.hbm [shape: f32[16,32], index: 6, kind: output, shape index: {0}]
  %s7 = inlined_call_operand.hbm [shape: f32[16,32], index: 7, kind: output, shape index: {1}]
  %8 = xla_tuple %s6, %s7
  %s9 = sld [smem:[#allocation0]]
  $region77: #{tpu_custom_call.1} parent=0
    _
  %s11 = ssub.s32 1, %s9
  %s12 = scalar_select 0, %s11, %s9
  $region1: #{tpu_custom_call.1} parent=0
    #allocation2 [shape = 'u8[8192]{0}', space=vmem, size = 0x2000, scoped, tag = 'input window, operand 0']
    #allocation3 [shape = 's32[2]{0}', space=sflag, size = 0x8, scoped, tag = 'scoped memory for tpu_custom_call.1']
    #allocation4 [shape = 's32[2]{0}', space=sflag, size = 0x8, scoped, tag = 'scoped memory for tpu_custom_call.1']
    #allocation5 [shape = 'u8[8192]{0}', space=vmem, size = 0x2000, scoped, tag = 'input window, operand 1']
    #allocation6 [shape = 's32[2]{0}', space=sflag, size = 0x8, scoped, tag = 'scoped memory for tpu_custom_call.1']
    #allocation7 [shape = 'u8[8192]{0}', space=vmem, size = 0x2000, scoped, tag = 'input window, operand 2, single buffered']
    #allocation8 [shape = 'u8[8192]{0}', space=vmem, size = 0x2000, scoped, tag = 'output window, operand 0']
    #allocation9 [shape = 'u8[8192]{0}', space=vmem, size = 0x2000, scoped, tag = 'output window, operand 1']
    #allocation10 [shape = 's32[2]{0}', space=sflag, size = 0x8, scoped, tag = 'scoped memory for tpu_custom_call.1']
    %13 = vsyncpa [#allocation3], 0
    %s14 = scalar_lea.sflag [#allocation3], 1
    %15 = vsyncpa %s14, 0
    %16 = vsyncpa [#allocation6], 0
    %s17 = scalar_lea.sflag [#allocation6], 1
    %18 = vsyncpa %s17, 0
    %19 = vsyncpa [#allocation4], 0
    %s20 = scalar_lea.sflag [#allocation4], 1
    %21 = vsyncpa %s20, 0
    %22 = vsyncpa [#allocation10], 0
    %s23 = scalar_lea.sflag [#allocation10], 1
    %24 = vsyncpa %s23, 0
    loop: start=0, step=1, limit=4
    $region2: #{tpu_custom_call.1} parent=1 // loop_pre_header
      _
    $region3: #{tpu_custom_call.1} parent=1 // loop_header
      %s26 = sphi 0, %s30
      %p27 = scmp.ge.s32.totalorder %s26, 4
      %s36 = sphi 0, %s38
      %s39 = sphi 0, %s36
      %s40 = sphi 0, %s39
      %s56 = sphi 0, %s40
      %s62 = sphi 0, %s64
      %s65 = sphi 0, %s62
      %s66 = sphi 0, %s65
      %s82 = sphi 0, %s66
      %s86 = sphi 0, %s86
      %s88 = sphi 0, %s86
      %s89 = sphi 0, %s88
      %s103 = sphi 0, %s89
      %s107 = sphi 0, %s107
      %s109 = sphi 0, %s107
      %s110 = sphi 0, %s109
      %s124 = sphi 0, %s110
      %s128 = sphi 0, %s128
      %s130 = sphi 0, %s128
      %s131 = sphi 0, %s130
      %s145 = sphi 0, %s131
      %s149 = sphi 0, %s149
      %s151 = sphi 0, %s149
      %s152 = sphi 0, %s151
      %s166 = sphi 0, %s152
      %s172 = sphi 0, %s174
      %s175 = sphi 0, %s172
      %s176 = sphi 0, %s175
      %s192 = sphi 0, %s176
      %s198 = sphi 0, %s200
      %s201 = sphi 0, %s198
      %s202 = sphi 0, %s201
      %s218 = sphi 0, %s202
    $region4: #{tpu_custom_call.1} parent=1 // loop_header_branch
      %29 = sbr.rel (%p27) target = $region8
    $region5: #{tpu_custom_call.1} parent=1 // loop_body
      %s31 = ssub.s32 %s26, 1
      %s32 = ssub.s32 %s26, 2
      %s33 = sadd.s32 %s26, 1
      %s34 = ssub.s32 %s26, %s33
      %p35 = scmp.eq.s32.totalorder %s34, 0
      %s37 = sadd.s32 %s36, 1
      %s38 = scalar_select %p35, %s36, %s37
      %p41 = pneg %p35
      %p42 = scmp.eq.s32.totalorder %s26, 1
      %p43 = por %p41, %p42
      %p44 = scmp.ne.s32.totalorder %s36, %s39
      %p45 = scmp.eq.s32.totalorder %s26, 0
      %p46 = por %p44, %p45
      %p47 = scmp.ne.s32.totalorder %s36, %s39
      %p48 = scmp.eq.s32.totalorder %s31, 1
      %p49 = por %p47, %p48
      %p50 = scmp.ne.s32.totalorder %s39, %s40
      %p51 = scmp.eq.s32.totalorder %s31, 0
      %p52 = por %p50, %p51
      %p53 = scmp.ne.s32.totalorder %s39, %s40
      %p54 = scmp.eq.s32.totalorder %s32, 1
      %p55 = por %p53, %p54
      %p57 = scmp.ne.s32.totalorder %s40, %s56
      %p58 = scmp.eq.s32.totalorder %s32, 0
      %p59 = por %p57, %p58
      %s60 = ssub.s32 %s26, %s33
      %p61 = scmp.eq.s32.totalorder %s60, 0
      %s63 = sadd.s32 %s62, 1
      %s64 = scalar_select %p61, %s62, %s63
      %p67 = pneg %p61
      %p68 = scmp.eq.s32.totalorder %s26, 1
      %p69 = por %p67, %p68
      %p70 = scmp.ne.s32.totalorder %s62, %s65
      %p71 = scmp.eq.s32.totalorder %s26, 0
      %p72 = por %p70, %p71
      %p73 = scmp.ne.s32.totalorder %s62, %s65
      %p74 = scmp.eq.s32.totalorder %s31, 1
      %p75 = por %p73, %p74
      %p76 = scmp.ne.s32.totalorder %s65, %s66
      %p77 = scmp.eq.s32.totalorder %s31, 0
      %p78 = por %p76, %p77
      %p79 = scmp.ne.s32.totalorder %s65, %s66
      %p80 = scmp.eq.s32.totalorder %s32, 1
      %p81 = por %p79, %p80
      %p83 = scmp.ne.s32.totalorder %s66, %s82
      %p84 = scmp.eq.s32.totalorder %s32, 0
      %p85 = por %p83, %p84
      %s87 = sadd.s32 %s86, 1
      %p90 = scmp.eq.s32.totalorder %s26, 1
      %p91 = scmp.ne.s32.totalorder %s86, %s88
      %p92 = scmp.eq.s32.totalorder %s26, 0
      %p93 = por %p91, %p92
      %p94 = scmp.ne.s32.totalorder %s86, %s88
      %p95 = scmp.eq.s32.totalorder %s31, 1
      %p96 = por %p94, %p95
      %p97 = scmp.ne.s32.totalorder %s88, %s89
      %p98 = scmp.eq.s32.totalorder %s31, 0
      %p99 = por %p97, %p98
      %p100 = scmp.ne.s32.totalorder %s88, %s89
      %p101 = scmp.eq.s32.totalorder %s32, 1
      %p102 = por %p100, %p101
      %p104 = scmp.ne.s32.totalorder %s89, %s103
      %p105 = scmp.eq.s32.totalorder %s32, 0
      %p106 = por %p104, %p105
      %s108 = sadd.s32 %s107, 1
      %p111 = scmp.eq.s32.totalorder %s26, 1
      %p112 = scmp.ne.s32.totalorder %s107, %s109
      %p113 = scmp.eq.s32.totalorder %s26, 0
      %p114 = por %p112, %p113
      %p115 = scmp.ne.s32.totalorder %s107, %s109
      %p116 = scmp.eq.s32.totalorder %s31, 1
      %p117 = por %p115, %p116
      %p118 = scmp.ne.s32.totalorder %s109, %s110
      %p119 = scmp.eq.s32.totalorder %s31, 0
      %p120 = por %p118, %p119
      %p121 = scmp.ne.s32.totalorder %s109, %s110
      %p122 = scmp.eq.s32.totalorder %s32, 1
      %p123 = por %p121, %p122
      %p125 = scmp.ne.s32.totalorder %s110, %s124
      %p126 = scmp.eq.s32.totalorder %s32, 0
      %p127 = por %p125, %p126
      %s129 = sadd.s32 %s128, 1
      %p132 = scmp.eq.s32.totalorder %s26, 1
      %p133 = scmp.ne.s32.totalorder %s128, %s130
      %p134 = scmp.eq.s32.totalorder %s26, 0
      %p135 = por %p133, %p134
      %p136 = scmp.ne.s32.totalorder %s128, %s130
      %p137 = scmp.eq.s32.totalorder %s31, 1
      %p138 = por %p136, %p137
      %p139 = scmp.ne.s32.totalorder %s130, %s131
      %p140 = scmp.eq.s32.totalorder %s31, 0
      %p141 = por %p139, %p140
      %p142 = scmp.ne.s32.totalorder %s130, %s131
      %p143 = scmp.eq.s32.totalorder %s32, 1
      %p144 = por %p142, %p143
      %p146 = scmp.ne.s32.totalorder %s131, %s145
      %p147 = scmp.eq.s32.totalorder %s32, 0
      %p148 = por %p146, %p147
      %s150 = sadd.s32 %s149, 1
      %p153 = scmp.eq.s32.totalorder %s26, 1
      %p154 = scmp.ne.s32.totalorder %s149, %s151
      %p155 = scmp.eq.s32.totalorder %s26, 0
      %p156 = por %p154, %p155
      %p157 = scmp.ne.s32.totalorder %s149, %s151
      %p158 = scmp.eq.s32.totalorder %s31, 1
      %p159 = por %p157, %p158
      %p160 = scmp.ne.s32.totalorder %s151, %s152
      %p161 = scmp.eq.s32.totalorder %s31, 0
      %p162 = por %p160, %p161
      %p163 = scmp.ne.s32.totalorder %s151, %s152
      %p164 = scmp.eq.s32.totalorder %s32, 1
      %p165 = por %p163, %p164
      %p167 = scmp.ne.s32.totalorder %s152, %s166
      %p168 = scmp.eq.s32.totalorder %s32, 0
      %p169 = por %p167, %p168
      %s170 = ssub.s32 %s26, %s33
      %p171 = scmp.eq.s32.totalorder %s170, 0
      %s173 = sadd.s32 %s172, 1
      %s174 = scalar_select %p171, %s172, %s173
      %p177 = pneg %p171
      %p178 = scmp.eq.s32.totalorder %s26, 1
      %p179 = por %p177, %p178
      %p180 = scmp.ne.s32.totalorder %s172, %s175
      %p181 = scmp.eq.s32.totalorder %s26, 0
      %p182 = por %p180, %p181
      %p183 = scmp.ne.s32.totalorder %s172, %s175
      %p184 = scmp.eq.s32.totalorder %s31, 1
      %p185 = por %p183, %p184
      %p186 = scmp.ne.s32.totalorder %s175, %s176
      %p187 = scmp.eq.s32.totalorder %s31, 0
      %p188 = por %p186, %p187
      %p189 = scmp.ne.s32.totalorder %s175, %s176
      %p190 = scmp.eq.s32.totalorder %s32, 1
      %p191 = por %p189, %p190
      %p193 = scmp.ne.s32.totalorder %s176, %s192
      %p194 = scmp.eq.s32.totalorder %s32, 0
      %p195 = por %p193, %p194
      %s196 = ssub.s32 %s26, %s33
      %p197 = scmp.eq.s32.totalorder %s196, 0
      %s199 = sadd.s32 %s198, 1
      %s200 = scalar_select %p197, %s198, %s199
      %p203 = pneg %p197
      %p204 = scmp.eq.s32.totalorder %s26, 1
      %p205 = por %p203, %p204
      %p206 = scmp.ne.s32.totalorder %s198, %s201
      %p207 = scmp.eq.s32.totalorder %s26, 0
      %p208 = por %p206, %p207
      %p209 = scmp.ne.s32.totalorder %s198, %s201
      %p210 = scmp.eq.s32.totalorder %s31, 1
      %p211 = por %p209, %p210
      %p212 = scmp.ne.s32.totalorder %s201, %s202
      %p213 = scmp.eq.s32.totalorder %s31, 0
      %p214 = por %p212, %p213
      %p215 = scmp.ne.s32.totalorder %s201, %s202
      %p216 = scmp.eq.s32.totalorder %s32, 1
      %p217 = por %p215, %p216
      %p219 = scmp.ne.s32.totalorder %s202, %s218
      %p220 = scmp.eq.s32.totalorder %s32, 0
      %p221 = por %p219, %p220
      %p222 = scmp.le.s32.totalorder 1, %s26
      %p223 = scmp.lt.s32.totalorder %s26, 3
      %p224 = pnand %p222, %p223
      %p225 = pneg %p224
      // Predicated region
      $region9: #{tpu_custom_call.1} parent=5 // pred_check
        _
      $region10: #{tpu_custom_call.1} parent=5 // pred_check_branch
        %227 = sbr.rel (%p224) target = $region12
      $region11: #{tpu_custom_call.1} parent=5 // pred_region
        %s228 = ssub.s32 %s26, 1
        // Predicated region
        $region13: #{tpu_custom_call.1} parent=11 // pred_check
          %p229 = pneg %p99
        $region14: #{tpu_custom_call.1} parent=11 // pred_check_branch
          %231 = sbr.rel (%p229) target = $region16
        $region15: #{tpu_custom_call.1} parent=11 // pred_region
          %s233 = ssub.s32 256, 256
          %234 = vsyncadd [#allocation6], %s233
          %s235 = sshll.u32 [#allocation7], 4
          %s236 = int_to_ptr.vmem [resolvable:$true] %s235
          %241 = dma.hbm_to_vmem [thread:$0]  %s2, 256, %s236, [#allocation6], 128, 128, 8
        $region16: #{tpu_custom_call.1} parent=11 // pred_fallthru
          _
        // Predicated region
        $region17: #{tpu_custom_call.1} parent=11 // pred_check
          %p242 = pneg %p120
        $region18: #{tpu_custom_call.1} parent=11 // pred_check_branch
          %244 = sbr.rel (%p242) target = $region20
        $region19: #{tpu_custom_call.1} parent=11 // pred_region
          _
        $region20: #{tpu_custom_call.1} parent=11 // pred_fallthru
          _
        // Predicated region
        $region21: #{tpu_custom_call.1} parent=11 // pred_check
          %p245 = pneg %p141
        $region22: #{tpu_custom_call.1} parent=11 // pred_check_branch
          %247 = sbr.rel (%p245) target = $region24
        $region23: #{tpu_custom_call.1} parent=11 // pred_region
          _
        $region24: #{tpu_custom_call.1} parent=11 // pred_fallthru
          _
        // Predicated region
        $region25: #{tpu_custom_call.1} parent=11 // pred_check
          %p248 = pneg %p162
        $region26: #{tpu_custom_call.1} parent=11 // pred_check_branch
          %250 = sbr.rel (%p248) target = $region28
        $region27: #{tpu_custom_call.1} parent=11 // pred_region
          _
        $region28: #{tpu_custom_call.1} parent=11 // pred_fallthru
          _
      $region12: #{tpu_custom_call.1} parent=5 // pred_fallthru
        _
      %p251 = scmp.lt.s32.totalorder %s26, 2
      // Predicated region
      $region29: #{tpu_custom_call.1} parent=5 // pred_check
        %p252 = pneg %p251
      $region30: #{tpu_custom_call.1} parent=5 // pred_check_branch
        %254 = sbr.rel (%p252) target = $region32
      $region31: #{tpu_custom_call.1} parent=5 // pred_region
        // Predicated region
        $region33: #{tpu_custom_call.1} parent=31 // pred_check
          %p255 = pneg %p46
        $region34: #{tpu_custom_call.1} parent=31 // pred_check_branch
          %257 = sbr.rel (%p255) target = $region36
        $region35: #{tpu_custom_call.1} parent=31 // pred_region
          %s258 = sand.u32 %s36, 1
          %s259 = scalar_lea.sflag [#allocation3], %s258
          %s260 = sand.u32 %s36, 1
          %s261 = smul.addr %s260, 8
          %s262 = scalar_lea.vmem [#allocation2], %s261
          %s264 = ssub.s32 128, 128
          %265 = vsyncadd %s259, %s264
          %s266 = smul.addr %s26, 128
          %s267 = scalar_lea.hbm %s0, %s266
          %s269 = sshll.u32 %s262, 4
          %s270 = int_to_ptr.vmem [resolvable:$true] %s269
          %272 = dma.hbm_to_vmem [thread:$0]  %s267, 128, %s270, %s259
        $region36: #{tpu_custom_call.1} parent=31 // pred_fallthru
          _
        // Predicated region
        $region37: #{tpu_custom_call.1} parent=31 // pred_check
          %p273 = pneg %p72
        $region38: #{tpu_custom_call.1} parent=31 // pred_check_branch
          %275 = sbr.rel (%p273) target = $region40
        $region39: #{tpu_custom_call.1} parent=31 // pred_region
          %s276 = sand.u32 %s26, 1
          %s277 = scalar_lea.sflag [#allocation6], %s276
          %s278 = sand.u32 %s62, 1
          %s279 = smul.addr %s278, 8
          %s280 = scalar_lea.vmem [#allocation5], %s279
          %s282 = ssub.s32 128, 128
          %283 = vsyncadd %s277, %s282
          %s284 = smul.addr %s26, 128
          %s285 = scalar_lea.hbm %s1, %s284
          %s287 = sshll.u32 %s280, 4
          %s288 = int_to_ptr.vmem [resolvable:$true] %s287
          %290 = dma.hbm_to_vmem [thread:$0]  %s285, 128, %s288, %s277
        $region40: #{tpu_custom_call.1} parent=31 // pred_fallthru
          _
      $region32: #{tpu_custom_call.1} parent=5 // pred_fallthru
        _
      %p291 = scmp.le.s32.totalorder 1, %s26
      %p292 = scmp.lt.s32.totalorder %s26, 3
      %p293 = pnand %p291, %p292
      %p294 = pneg %p293
      // Predicated region
      $region41: #{tpu_custom_call.1} parent=5 // pred_check
        _
      $region42: #{tpu_custom_call.1} parent=5 // pred_check_branch
        %296 = sbr.rel (%p293) target = $region44
      $region43: #{tpu_custom_call.1} parent=5 // pred_region
        %s297 = ssub.s32 %s26, 1
        %s298 = sand.u32 %s39, 1
        %s299 = scalar_lea.sflag [#allocation3], %s298
        %s300 = sand.u32 %s39, 1
        %s301 = smul.addr %s300, 8
        %s302 = scalar_lea.vmem [#allocation2], %s301
        // Predicated region
        $region45: #{tpu_custom_call.1} parent=43 // pred_check
          %p303 = pneg %p52
        $region46: #{tpu_custom_call.1} parent=43 // pred_check_branch
          %305 = sbr.rel (%p303) target = $region48
        $region47: #{tpu_custom_call.1} parent=43 // pred_region
          %306 = dma.done %s299, 128
        $region48: #{tpu_custom_call.1} parent=43 // pred_fallthru
          _
        %s307 = sand.u32 %s31, 1
        %s308 = scalar_lea.sflag [#allocation6], %s307
        %s309 = sand.u32 %s65, 1
        %s310 = smul.addr %s309, 8
        %s311 = scalar_lea.vmem [#allocation5], %s310
        // Predicated region
        $region49: #{tpu_custom_call.1} parent=43 // pred_check
          %p312 = pneg %p78
        $region50: #{tpu_custom_call.1} parent=43 // pred_check_branch
          %314 = sbr.rel (%p312) target = $region52
        $region51: #{tpu_custom_call.1} parent=43 // pred_region
          %315 = dma.done %s308, 128
        $region52: #{tpu_custom_call.1} parent=43 // pred_fallthru
          _
        // Predicated region
        $region53: #{tpu_custom_call.1} parent=43 // pred_check
          %p316 = pneg %p99
        $region54: #{tpu_custom_call.1} parent=43 // pred_check_branch
          %318 = sbr.rel (%p316) target = $region56
        $region55: #{tpu_custom_call.1} parent=43 // pred_region
          %319 = dma.done [#allocation6], 256
        $region56: #{tpu_custom_call.1} parent=43 // pred_fallthru
          _
        %s320 = sand.u32 %s39, 1
        %s321 = scalar_lea.sflag [#allocation3], %s320
        %s322 = sand.u32 %s39, 1
        %s323 = smul.addr %s322, 8
        %s324 = scalar_lea.vmem [#allocation2], %s323
        %p325 = pneg %p52
        %p326 = pneg %p49
        %s327 = sand.u32 %s31, 1
        %s328 = scalar_lea.sflag [#allocation6], %s327
        %s329 = sand.u32 %s65, 1
        %s330 = smul.addr %s329, 8
        %s331 = scalar_lea.vmem [#allocation5], %s330
        %p332 = pneg %p78
        %p333 = pneg %p75
        %p334 = pneg %p99
        %p335 = pneg %p96
        %p336 = pneg %p120
        %p337 = pneg %p117
        %p338 = pneg %p141
        %p339 = pneg %p138
        %p340 = pneg %p162
        %p341 = pneg %p159
        %p342 = pneg %p188
        %p343 = pneg %p185
        %s344 = sand.u32 %s175, 1
        %s345 = scalar_lea.sflag [#allocation4], %s344
        %s346 = sand.u32 %s175, 1
        %s347 = smul.addr %s346, 8
        %s348 = scalar_lea.vmem [#allocation8], %s347
        %p349 = pneg %p214
        %p350 = pneg %p211
        %s351 = sand.u32 %s201, 1
        %s352 = scalar_lea.sflag [#allocation10], %s351
        %s353 = sand.u32 %s201, 1
        %s354 = smul.addr %s353, 8
        %s355 = scalar_lea.vmem [#allocation9], %s354
        %v356 = vld [vmem:[%s302] sm:$0xff]
        %v357 = vld [vmem:[%s3] sm:$0xff]
        %v358 = vld [vmem:[%s3 + $0x8] sm:$0xff]
        %v359 = vld [vmem:[%s3 + $0x10] sm:$0xff]
        %v360 = vld [vmem:[%s3 + $0x18] sm:$0xff]
        %vm361 = vcmask 261120
        %v363 = vsel %vm361, %v356, 0
        %365 = vmatprep.subr.mxu0 0.0
        %366 = vmatpush1.msra.mxu0 %v357
        %367 = vmatprep.subr.mxu0 0.0
        %368 = vmatpush1.msra.mxu0 %v358
        %369 = vmatprep.subr.mxu0 0.0
        %370 = vmatpush1.msra.mxu0 %v359
        %371 = vmatprep.subr.mxu0 0.0
        %372 = vmatpush1.msra.mxu0 %v360
        %373 = vmatprep.subr.mxu0 0.0
        %374 = vmatpush1.msra.mxu0 0.0
        %375 = vmatprep.subr.mxu0 0.0
        %376 = vmatpush1.msra.mxu0 0.0
        %377 = vmatprep.subr.mxu0 0.0
        %378 = vmatpush1.msra.mxu0 0.0
        %379 = vmatprep.subr.mxu0 0.0
        %380 = vmatpush1.msra.mxu0 0.0
        %381 = vmatprep.subr.mxu0 0.0
        %382 = vmatpush1.msra.mxu0 0.0
        %383 = vmatprep.subr.mxu0 0.0
        %384 = vmatpush1.msra.mxu0 0.0
        %385 = vmatprep.subr.mxu0 0.0
        %386 = vmatpush1.msra.mxu0 0.0
        %387 = vmatprep.subr.mxu0 0.0
        %388 = vmatpush1.msra.mxu0 0.0
        %389 = vmatprep.subr.mxu0 0.0
        %390 = vmatpush1.msra.mxu0 0.0
        %391 = vmatprep.subr.mxu0 0.0
        %392 = vmatpush1.msra.mxu0 0.0
        %393 = vmatprep.subr.mxu0 0.0
        %394 = vmatpush1.msra.mxu0 0.0
        %395 = vmatprep.subr.mxu0 0.0
        %396 = vmatpush1.msra.mxu0 0.0
        %397 = vmatprep.subr.mxu0 0.0
        %398 = vmatpush1.msra.mxu0 0.0
        %399 = vmatprep.subr.mxu0 0.0
        %400 = vmatpush1.msra.mxu0 0.0
        %401 = vmatprep.subr.mxu0 0.0
        %402 = vmatpush1.msra.mxu0 0.0
        %403 = vmatprep.subr.mxu0 0.0
        %404 = vmatpush1.msra.mxu0 0.0
        %405 = vmatprep.subr.mxu0 0.0
        %406 = vmatpush1.msra.mxu0 0.0
        %407 = vmatprep.subr.mxu0 0.0
        %408 = vmatpush1.msra.mxu0 0.0
        %409 = vmatprep.subr.mxu0 0.0
        %410 = vmatpush1.msra.mxu0 0.0
        %411 = vmatprep.subr.mxu0 0.0
        %412 = vmatpush1.msra.mxu0 0.0
        %413 = vmatprep.subr.mxu0 0.0
        %414 = vmatpush1.msra.mxu0 0.0
        %415 = vmatprep.subr.mxu0 0.0
        %416 = vmatpush1.msra.mxu0 0.0
        %417 = vmatprep.subr.mxu0 0.0
        %418 = vmatpush1.msra.mxu0 0.0
        %419 = vmatprep.subr.mxu0 0.0
        %420 = vmatpush1.msra.mxu0 0.0
        %421 = vmatprep.subr.mxu0 0.0
        %422 = vmatpush1.msra.mxu0 0.0
        %423 = vmatprep.subr.mxu0 0.0
        %424 = vmatpush1.msra.mxu0 0.0
        %425 = vmatprep.subr.mxu0 0.0
        %426 = vmatpush1.msra.mxu0 0.0
        %427 = vmatprep.subr.mxu0 0.0
        %428 = vmatpush1.msra.mxu0 0.0
        %429 = vmatprep.mubr.f32.mxu0 0.0
        %430 = vmatmul.mubr.f32.gmra.mrb[0].mxu0 %v363
        %v431 = vpop.f32.mrb[0].mxu0
        %v432 = vadd.f32 0.0, %v431
        %v433 = vpop.f32.mrb[0].mxu0
        %434 = vdwg.mxu0
        %vm435 = vcmask 130048
        %v436 = vsel %vm435, %v432, -inf
        %437 = vmax.xlane.f32.xlu0 %v436
        %v438 = vpop.xlane.xlu0 %437
        %v439 = vsub.f32 %v432, %v438
        %v440 = vmul.f32 %v439, 1.442695
        %v441 = vpow.pop %v440
        %v442 = vsel %vm435, %v441, 0.0
        %443 = vadd.xlane.f32.xlu0 %v442
        %v444 = vpop.xlane.xlu0 %443
        %v445 = vrcp.pop %v444
        %v446 = vmul.f32 %v441, %v445
        %v447 = vld [vmem:[#allocation7] sm:$0xff]
        %v448 = vld [vmem:[#allocation7 + $0x8] sm:$0xff]
        %v450 = vsel %vm435, %v446, 0
        %452 = vmatprep.subr.mxu0 0.0
        %453 = vmatpush1.msra.mxu0 %v447
        %454 = vmatprep.subr.mxu0 0.0
        %455 = vmatpush1.msra.mxu0 %v448
        %456 = vmatprep.subr.mxu0 0.0
        %457 = vmatpush1.msra.mxu0 0.0
        %458 = vmatprep.subr.mxu0 0.0
        %459 = vmatpush1.msra.mxu0 0.0
        %460 = vmatprep.subr.mxu0 0.0
        %461 = vmatpush1.msra.mxu0 0.0
        %462 = vmatprep.subr.mxu0 0.0
        %463 = vmatpush1.msra.mxu0 0.0
        %464 = vmatprep.subr.mxu0 0.0
        %465 = vmatpush1.msra.mxu0 0.0
        %466 = vmatprep.subr.mxu0 0.0
        %467 = vmatpush1.msra.mxu0 0.0
        %468 = vmatprep.subr.mxu0 0.0
        %469 = vmatpush1.msra.mxu0 0.0
        %470 = vmatprep.subr.mxu0 0.0
        %471 = vmatpush1.msra.mxu0 0.0
        %472 = vmatprep.subr.mxu0 0.0
        %473 = vmatpush1.msra.mxu0 0.0
        %474 = vmatprep.subr.mxu0 0.0
        %475 = vmatpush1.msra.mxu0 0.0
        %476 = vmatprep.subr.mxu0 0.0
        %477 = vmatpush1.msra.mxu0 0.0
        %478 = vmatprep.subr.mxu0 0.0
        %479 = vmatpush1.msra.mxu0 0.0
        %480 = vmatprep.subr.mxu0 0.0
        %481 = vmatpush1.msra.mxu0 0.0
        %482 = vmatprep.subr.mxu0 0.0
        %483 = vmatpush1.msra.mxu0 0.0
        %484 = vmatprep.subr.mxu0 0.0
        %485 = vmatpush1.msra.mxu0 0.0
        %486 = vmatprep.subr.mxu0 0.0
        %487 = vmatpush1.msra.mxu0 0.0
        %488 = vmatprep.subr.mxu0 0.0
        %489 = vmatpush1.msra.mxu0 0.0
        %490 = vmatprep.subr.mxu0 0.0
        %491 = vmatpush1.msra.mxu0 0.0
        %492 = vmatprep.subr.mxu0 0.0
        %493 = vmatpush1.msra.mxu0 0.0
        %494 = vmatprep.subr.mxu0 0.0
        %495 = vmatpush1.msra.mxu0 0.0
        %496 = vmatprep.subr.mxu0 0.0
        %497 = vmatpush1.msra.mxu0 0.0
        %498 = vmatprep.subr.mxu0 0.0
        %499 = vmatpush1.msra.mxu0 0.0
        %500 = vmatprep.subr.mxu0 0.0
        %501 = vmatpush1.msra.mxu0 0.0
        %502 = vmatprep.subr.mxu0 0.0
        %503 = vmatpush1.msra.mxu0 0.0
        %504 = vmatprep.subr.mxu0 0.0
        %505 = vmatpush1.msra.mxu0 0.0
        %506 = vmatprep.subr.mxu0 0.0
        %507 = vmatpush1.msra.mxu0 0.0
        %508 = vmatprep.subr.mxu0 0.0
        %509 = vmatpush1.msra.mxu0 0.0
        %510 = vmatprep.subr.mxu0 0.0
        %511 = vmatpush1.msra.mxu0 0.0
        %512 = vmatprep.subr.mxu0 0.0
        %513 = vmatpush1.msra.mxu0 0.0
        %514 = vmatprep.subr.mxu0 0.0
        %515 = vmatpush1.msra.mxu0 0.0
        %516 = vmatprep.mubr.f32.mxu0 0.0
        %517 = vmatmul.mubr.f32.gmra.mrb[0].mxu0 %v450
        %v518 = vpop.f32.mrb[0].mxu0
        %v519 = vadd.f32 0.0, %v518
        %v520 = vpop.f32.mrb[0].mxu0
        %521 = vdwg.mxu0
        %522 = vst.msk [vmem:[%s348] sm:$0xff] %vm361, %v519
        %v523 = vld [vmem:[%s311] sm:$0xff]
        %v524 = vld [vmem:[%s5] sm:$0xff]
        %v525 = vld [vmem:[%s5 + $0x8] sm:$0xff]
        %v526 = vld [vmem:[%s5 + $0x10] sm:$0xff]
        %v527 = vld [vmem:[%s5 + $0x18] sm:$0xff]
        %v529 = vsel %vm361, %v523, 0
        %531 = vmatprep.subr.mxu0 0.0
        %532 = vmatpush1.msra.mxu0 %v524
        %533 = vmatprep.subr.mxu0 0.0
        %534 = vmatpush1.msra.mxu0 %v525
        %535 = vmatprep.subr.mxu0 0.0
        %536 = vmatpush1.msra.mxu0 %v526
        %537 = vmatprep.subr.mxu0 0.0
        %538 = vmatpush1.msra.mxu0 %v527
        %539 = vmatprep.subr.mxu0 0.0
        %540 = vmatpush1.msra.mxu0 0.0
        %541 = vmatprep.subr.mxu0 0.0
        %542 = vmatpush1.msra.mxu0 0.0
        %543 = vmatprep.subr.mxu0 0.0
        %544 = vmatpush1.msra.mxu0 0.0
        %545 = vmatprep.subr.mxu0 0.0
        %546 = vmatpush1.msra.mxu0 0.0
        %547 = vmatprep.subr.mxu0 0.0
        %548 = vmatpush1.msra.mxu0 0.0
        %549 = vmatprep.subr.mxu0 0.0
        %550 = vmatpush1.msra.mxu0 0.0
        %551 = vmatprep.subr.mxu0 0.0
        %552 = vmatpush1.msra.mxu0 0.0
        %553 = vmatprep.subr.mxu0 0.0
        %554 = vmatpush1.msra.mxu0 0.0
        %555 = vmatprep.subr.mxu0 0.0
        %556 = vmatpush1.msra.mxu0 0.0
        %557 = vmatprep.subr.mxu0 0.0
        %558 = vmatpush1.msra.mxu0 0.0
        %559 = vmatprep.subr.mxu0 0.0
        %560 = vmatpush1.msra.mxu0 0.0
        %561 = vmatprep.subr.mxu0 0.0
        %562 = vmatpush1.msra.mxu0 0.0
        %563 = vmatprep.subr.mxu0 0.0
        %564 = vmatpush1.msra.mxu0 0.0
        %565 = vmatprep.subr.mxu0 0.0
        %566 = vmatpush1.msra.mxu0 0.0
        %567 = vmatprep.subr.mxu0 0.0
        %568 = vmatpush1.msra.mxu0 0.0
        %569 = vmatprep.subr.mxu0 0.0
        %570 = vmatpush1.msra.mxu0 0.0
        %571 = vmatprep.subr.mxu0 0.0
        %572 = vmatpush1.msra.mxu0 0.0
        %573 = vmatprep.subr.mxu0 0.0
        %574 = vmatpush1.msra.mxu0 0.0
        %575 = vmatprep.subr.mxu0 0.0
        %576 = vmatpush1.msra.mxu0 0.0
        %577 = vmatprep.subr.mxu0 0.0
        %578 = vmatpush1.msra.mxu0 0.0
        %579 = vmatprep.subr.mxu0 0.0
        %580 = vmatpush1.msra.mxu0 0.0
        %581 = vmatprep.subr.mxu0 0.0
        %582 = vmatpush1.msra.mxu0 0.0
        %583 = vmatprep.subr.mxu0 0.0
        %584 = vmatpush1.msra.mxu0 0.0
        %585 = vmatprep.subr.mxu0 0.0
        %586 = vmatpush1.msra.mxu0 0.0
        %587 = vmatprep.subr.mxu0 0.0
        %588 = vmatpush1.msra.mxu0 0.0
        %589 = vmatprep.subr.mxu0 0.0
        %590 = vmatpush1.msra.mxu0 0.0
        %591 = vmatprep.subr.mxu0 0.0
        %592 = vmatpush1.msra.mxu0 0.0
        %593 = vmatprep.subr.mxu0 0.0
        %594 = vmatpush1.msra.mxu0 0.0
        %595 = vmatprep.mubr.f32.mxu0 0.0
        %596 = vmatmul.mubr.f32.gmra.mrb[0].mxu0 %v529
        %v597 = vpop.f32.mrb[0].mxu0
        %v598 = vadd.f32 0.0, %v597
        %v599 = vpop.f32.mrb[0].mxu0
        %600 = vdwg.mxu0
        %v601 = vsel %vm361, %v598, -inf
        %602 = vmax.xlane.f32.xlu0 %v601
        %v603 = vpop.xlane.xlu0 %602
        %v604 = vsub.f32 %v598, %v603
        %v605 = vmul.f32 %v604, 1.442695
        %v606 = vpow.pop %v605
        %v607 = vsel %vm361, %v606, 0.0
        %608 = vadd.xlane.f32.xlu0 %v607
        %v609 = vpop.xlane.xlu0 %608
        %v610 = vrcp.pop %v609
        %v611 = vmul.f32 %v606, %v610
        %v612 = vld [vmem:[%s4] sm:$0xff]
        %v613 = vld [vmem:[%s4 + $0x8] sm:$0xff]
        %v614 = vld [vmem:[%s4 + $0x10] sm:$0xff]
        %v615 = vld [vmem:[%s4 + $0x18] sm:$0xff]
        %v617 = vsel %vm361, %v611, 0
        %619 = vmatprep.subr.mxu0 0.0
        %620 = vmatpush1.msra.mxu0 %v612
        %621 = vmatprep.subr.mxu0 0.0
        %622 = vmatpush1.msra.mxu0 %v613
        %623 = vmatprep.subr.mxu0 0.0
        %624 = vmatpush1.msra.mxu0 %v614
        %625 = vmatprep.subr.mxu0 0.0
        %626 = vmatpush1.msra.mxu0 %v615
        %627 = vmatprep.subr.mxu0 0.0
        %628 = vmatpush1.msra.mxu0 0.0
        %629 = vmatprep.subr.mxu0 0.0
        %630 = vmatpush1.msra.mxu0 0.0
        %631 = vmatprep.subr.mxu0 0.0
        %632 = vmatpush1.msra.mxu0 0.0
        %633 = vmatprep.subr.mxu0 0.0
        %634 = vmatpush1.msra.mxu0 0.0
        %635 = vmatprep.subr.mxu0 0.0
        %636 = vmatpush1.msra.mxu0 0.0
        %637 = vmatprep.subr.mxu0 0.0
        %638 = vmatpush1.msra.mxu0 0.0
        %639 = vmatprep.subr.mxu0 0.0
        %640 = vmatpush1.msra.mxu0 0.0
        %641 = vmatprep.subr.mxu0 0.0
        %642 = vmatpush1.msra.mxu0 0.0
        %643 = vmatprep.subr.mxu0 0.0
        %644 = vmatpush1.msra.mxu0 0.0
        %645 = vmatprep.subr.mxu0 0.0
        %646 = vmatpush1.msra.mxu0 0.0
        %647 = vmatprep.subr.mxu0 0.0
        %648 = vmatpush1.msra.mxu0 0.0
        %649 = vmatprep.subr.mxu0 0.0
        %650 = vmatpush1.msra.mxu0 0.0
        %651 = vmatprep.subr.mxu0 0.0
        %652 = vmatpush1.msra.mxu0 0.0
        %653 = vmatprep.subr.mxu0 0.0
        %654 = vmatpush1.msra.mxu0 0.0
        %655 = vmatprep.subr.mxu0 0.0
        %656 = vmatpush1.msra.mxu0 0.0
        %657 = vmatprep.subr.mxu0 0.0
        %658 = vmatpush1.msra.mxu0 0.0
        %659 = vmatprep.subr.mxu0 0.0
        %660 = vmatpush1.msra.mxu0 0.0
        %661 = vmatprep.subr.mxu0 0.0
        %662 = vmatpush1.msra.mxu0 0.0
        %663 = vmatprep.subr.mxu0 0.0
        %664 = vmatpush1.msra.mxu0 0.0
        %665 = vmatprep.subr.mxu0 0.0
        %666 = vmatpush1.msra.mxu0 0.0
        %667 = vmatprep.subr.mxu0 0.0
        %668 = vmatpush1.msra.mxu0 0.0
        %669 = vmatprep.subr.mxu0 0.0
        %670 = vmatpush1.msra.mxu0 0.0
        %671 = vmatprep.subr.mxu0 0.0
        %672 = vmatpush1.msra.mxu0 0.0
        %673 = vmatprep.subr.mxu0 0.0
        %674 = vmatpush1.msra.mxu0 0.0
        %675 = vmatprep.subr.mxu0 0.0
        %676 = vmatpush1.msra.mxu0 0.0
        %677 = vmatprep.subr.mxu0 0.0
        %678 = vmatpush1.msra.mxu0 0.0
        %679 = vmatprep.subr.mxu0 0.0
        %680 = vmatpush1.msra.mxu0 0.0
        %681 = vmatprep.subr.mxu0 0.0
        %682 = vmatpush1.msra.mxu0 0.0
        %683 = vmatprep.mubr.f32.mxu0 0.0
        %684 = vmatmul.mubr.f32.gmra.mrb[0].mxu0 %v617
        %v685 = vpop.f32.mrb[0].mxu0
        %v686 = vadd.f32 0.0, %v685
        %v687 = vpop.f32.mrb[0].mxu0
        %688 = vdwg.mxu0
        %689 = vst.msk [vmem:[%s355] sm:$0xff] %vm361, %v686
        %s690 = sand.u32 %s175, 1
        %s691 = scalar_lea.sflag [#allocation4], %s690
        %s692 = sand.u32 %s175, 1
        %s693 = smul.addr %s692, 8
        %s694 = scalar_lea.vmem [#allocation8], %s693
        %s695 = sand.u32 %s201, 1
        %s696 = scalar_lea.sflag [#allocation10], %s695
        %s697 = sand.u32 %s201, 1
        %s698 = smul.addr %s697, 8
        %s699 = scalar_lea.vmem [#allocation9], %s698
        // Predicated region
        $region57: #{tpu_custom_call.1} parent=43 // pred_check
          %p700 = pneg %p185
        $region58: #{tpu_custom_call.1} parent=43 // pred_check_branch
          %702 = sbr.rel (%p700) target = $region60
        $region59: #{tpu_custom_call.1} parent=43 // pred_region
          %s704 = ssub.s32 128, 128
          %705 = vsyncadd %s691, %s704
          %s706 = smul.addr %s31, 128
          %s707 = scalar_lea.hbm %s6, %s706
          %s709 = sshll.u32 %s694, 4
          %s710 = int_to_ptr.vmem [resolvable:$true] %s709
          %712 = dma.vmem_to_hbm [thread:$0]  %s710, 128, %s707, %s691
        $region60: #{tpu_custom_call.1} parent=43 // pred_fallthru
          _
        // Predicated region
        $region61: #{tpu_custom_call.1} parent=43 // pred_check
          %p713 = pneg %p211
        $region62: #{tpu_custom_call.1} parent=43 // pred_check_branch
          %715 = sbr.rel (%p713) target = $region64
        $region63: #{tpu_custom_call.1} parent=43 // pred_region
          %s717 = ssub.s32 128, 128
          %718 = vsyncadd %s696, %s717
          %s719 = smul.addr %s31, 128
          %s720 = scalar_lea.hbm %s7, %s719
          %s722 = sshll.u32 %s699, 4
          %s723 = int_to_ptr.vmem [resolvable:$true] %s722
          %725 = dma.vmem_to_hbm [thread:$0]  %s723, 128, %s720, %s696
        $region64: #{tpu_custom_call.1} parent=43 // pred_fallthru
          _
      $region44: #{tpu_custom_call.1} parent=5 // pred_fallthru
        _
      %p726 = scmp.le.s32.totalorder 2, %s26
      // Predicated region
      $region65: #{tpu_custom_call.1} parent=5 // pred_check
        %p727 = pneg %p726
      $region66: #{tpu_custom_call.1} parent=5 // pred_check_branch
        %729 = sbr.rel (%p727) target = $region68
      $region67: #{tpu_custom_call.1} parent=5 // pred_region
        %s730 = ssub.s32 %s26, 2
        // Predicated region
        $region69: #{tpu_custom_call.1} parent=67 // pred_check
          %p731 = pneg %p191
        $region70: #{tpu_custom_call.1} parent=67 // pred_check_branch
          %733 = sbr.rel (%p731) target = $region72
        $region71: #{tpu_custom_call.1} parent=67 // pred_region
          %s734 = sand.u32 %s176, 1
          %s735 = scalar_lea.sflag [#allocation4], %s734
          %s736 = sand.u32 %s176, 1
          %s737 = smul.addr %s736, 8
          %s738 = scalar_lea.vmem [#allocation8], %s737
          %739 = dma.done %s735, 128
        $region72: #{tpu_custom_call.1} parent=67 // pred_fallthru
          _
        // Predicated region
        $region73: #{tpu_custom_call.1} parent=67 // pred_check
          %p740 = pneg %p217
        $region74: #{tpu_custom_call.1} parent=67 // pred_check_branch
          %742 = sbr.rel (%p740) target = $region76
        $region75: #{tpu_custom_call.1} parent=67 // pred_region
          %s743 = sand.u32 %s202, 1
          %s744 = scalar_lea.sflag [#allocation10], %s743
          %s745 = sand.u32 %s202, 1
          %s746 = smul.addr %s745, 8
          %s747 = scalar_lea.vmem [#allocation9], %s746
          %748 = dma.done %s744, 128
        $region76: #{tpu_custom_call.1} parent=67 // pred_fallthru
          _
      $region68: #{tpu_custom_call.1} parent=5 // pred_fallthru
        _
    $region6: #{tpu_custom_call.1} parent=1 // loop_footer
      %s30 = sadd.s32 1, %s26
    $region7: #{tpu_custom_call.1} parent=1 // loop_footer_branch
      %25 = sbr.rel target = $region3
    $region8: #{tpu_custom_call.1} parent=1 // loop_exit
      _
    %749 = vsyncpa [#allocation3], 1
    %s750 = scalar_lea.sflag [#allocation3], 1
    %751 = vsyncpa %s750, 1
    %752 = vsyncpa [#allocation6], 1
    %s753 = scalar_lea.sflag [#allocation6], 1
    %754 = vsyncpa %s753, 1
    %755 = vsyncpa [#allocation4], 1
    %s756 = scalar_lea.sflag [#allocation4], 1
    %757 = vsyncpa %s756, 1
    %758 = vsyncpa [#allocation10], 1
    %s759 = scalar_lea.sflag [#allocation10], 1
    %760 = vsyncpa %s759, 1

</llo_original>
